<compile_context>
chip_gen: v7x
topology: tpu7x:2x2x1
jax: 0.10.0
libtpu: 0.0.40
codegen_flags: <defaults>
</compile_context>

<pallas_src>
import functools

import jax
import jax.numpy as jnp
from jax.experimental import pallas as pl
from jax.experimental.pallas import tpu as pltpu

_LANE = 128      # last-dim (lane) granularity
_SUBLANE = 8     # second-to-last (sublane) granularity


def _round_up(x, m):
    return ((x + m - 1) // m) * m


def _mlp_kernel(x_ref, *refs):
    """Fused L-layer MLP: h = relu(h @ w_i + b_i) for every layer.

    refs = (w0, b0, w1, b1, ..., w_{L-1}, b_{L-1}, o_ref).
    Everything is already padded lane/sublane-dense; intermediate activations
    stay in VMEM/vregs for the whole batch block.
    """
    o_ref = refs[-1]
    wb_refs = refs[:-1]
    h = x_ref[...].astype(jnp.float32)
    for i in range(0, len(wb_refs), 2):
        w = wb_refs[i][...]
        b = wb_refs[i + 1][...]
        acc = jnp.dot(h, w, preferred_element_type=jnp.float32)  # MXU
        h = jnp.maximum(acc + b.astype(jnp.float32), 0.0)        # VPU epilogue
    o_ref[...] = h.astype(o_ref.dtype)


def pad_params(params):
    """Zero-pad (w, b) pairs to lane-dense (128-multiple) feature dims."""
    padded = []
    for w, b in params:
        k, n = w.shape
        kp = _round_up(k, _LANE)
        npad = _round_up(n, _LANE)
        wp = jnp.zeros((kp, npad), w.dtype).at[:k, :n].set(w)
        bp = jnp.zeros((1, npad), b.dtype).at[0, :n].set(b)
        padded.append((wp, bp))
    return tuple(padded)


def _fused_mlp_padded(xp, padded_params, bm):
    """Single pallas_call over padded inputs. xp: (Mp, K0p), Mp % bm == 0."""
    Mp, K0p = xp.shape
    grid_m = Mp // bm
    Np_last = padded_params[-1][0].shape[1]

    flat = [xp]
    in_specs = [pl.BlockSpec((bm, K0p), lambda i: (i, 0))]
    flops = 0
    bytes_accessed = xp.size * xp.dtype.itemsize
    for wp, bp in padded_params:
        kp, npad = wp.shape
        in_specs.append(pl.BlockSpec((kp, npad), lambda i: (0, 0)))
        in_specs.append(pl.BlockSpec((1, npad), lambda i: (0, 0)))
        flat += [wp, bp]
        flops += 2 * Mp * kp * npad
        bytes_accessed += (wp.size + bp.size) * 4
    bytes_accessed += Mp * Np_last * 4

    # TODO(synk): once W*W*4B approaches the VMEM budget (real GPT-lite sizes),
    # switch the weight specs to K/N-tiled blocks with an f32 accumulator
    # scratch (K as trailing "arbitrary" grid axis) instead of full-extent.
    return pl.pallas_call(
        _mlp_kernel,
        out_shape=jax.ShapeDtypeStruct((Mp, Np_last), xp.dtype),
        grid_spec=pl.GridSpec(
            grid=(grid_m,),
            in_specs=in_specs,
            out_specs=pl.BlockSpec((bm, Np_last), lambda i: (i, 0)),
        ),
        compiler_params=pltpu.CompilerParams(
            dimension_semantics=("parallel",),      # megacore-shardable batch
            vmem_limit_bytes=32 * 1024 * 1024,      # safe on v5e/v6e/v7x
        ),
        cost_estimate=pl.CostEstimate(
            flops=flops, transcendentals=0, bytes_accessed=bytes_accessed),
    )(*flat)


@functools.partial(jax.jit, static_argnames=("out_size",))
def benchmark_model_forward(x, padded_params, out_size):
    """forward(x) == Sequential(Linear+ReLU, ..., Linear+ReLU)(x)."""
    M, K = x.shape
    K0p = padded_params[0][0].shape[0]
    # Pad batch to a sublane-multiple block; tile by <=256 rows for megacore.
    Mp = _round_up(max(M, _SUBLANE), _SUBLANE)
    bm = Mp if Mp <= 512 else 256
    Mp = _round_up(Mp, bm)
    xp = jnp.zeros((Mp, K0p), x.dtype).at[:M, :K].set(x)
    out = _fused_mlp_padded(xp, padded_params, bm)
    return out[:M, :out_size]


def init_benchmark_model_params(key, W, L, in_size, out_size):
    """Deterministic params matching nn.Linear shapes (w == torch weight.T)."""
    dims = [in_size] + [W] * (L - 1) + [out_size]
    params = []
    for li in range(L):
        key, kw, kb = jax.random.split(key, 3)
        fan_in, fan_out = dims[li], dims[li + 1]
        bound = 1.0 / jnp.sqrt(jnp.float32(fan_in))  # torch default uniform init
        w = jax.random.uniform(kw, (fan_in, fan_out), jnp.float32, -bound, bound)
        b = jax.random.uniform(kb, (fan_out,), jnp.float32, -bound, bound)
        params.append((w, b))
    return params


def _reference_forward(x, params):
    for w, b in params:
        x = jnp.maximum(x @ w + b, 0.0)
    return x


if __name__ == "__main__":
    # Small shapes consistent with the module: batch=4, in_size=16, W=32,
    # L=4 layers, out_size=8.
    batch, in_size, W, L, out_size = 4, 16, 32, 4, 8

    key = jax.random.PRNGKey(0)
    key, kx = jax.random.split(key)
    x = jax.random.normal(kx, (batch, in_size), jnp.float32)
    params = init_benchmark_model_params(key, W, L, in_size, out_size)
    padded_params = pad_params(params)

    out = benchmark_model_forward(x, padded_params, out_size)
    out = jax.block_until_ready(out)

    ref = _reference_forward(x, params)
    assert out.shape == (batch, out_size)
    assert jnp.allclose(out, ref, atol=1e-5, rtol=1e-5)

    print("KERNEL_OK")
</pallas_src>

<mosaic_0001>
module attributes {stable_mosaic.version = 11 : i64} {
  func.func @_mlp_kernel(%arg0: i32, %arg1: memref<8x128xf32, #tpu.memory_space<vmem>>, %arg2: memref<128x128xf32, #tpu.memory_space<vmem>>, %arg3: memref<1x128xf32, #tpu.memory_space<vmem>>, %arg4: memref<128x128xf32, #tpu.memory_space<vmem>>, %arg5: memref<1x128xf32, #tpu.memory_space<vmem>>, %arg6: memref<128x128xf32, #tpu.memory_space<vmem>>, %arg7: memref<1x128xf32, #tpu.memory_space<vmem>>, %arg8: memref<128x128xf32, #tpu.memory_space<vmem>>, %arg9: memref<1x128xf32, #tpu.memory_space<vmem>>, %arg10: memref<8x128xf32, #tpu.memory_space<vmem>>) attributes {dimension_semantics = [#tpu.dimension_semantics<parallel>], iteration_bounds = array<i64: 1>, scalar_prefetch = 0 : i64, scratch_operands = 0 : i64, tpu.core_type = #tpu.core_type<tc>, window_params = [{transform_indices = @transform_0, window_bounds = array<i64: 8, 128>}, {pipeline_mode = #tpu.pipeline_mode<synchronous>, transform_indices = @transform_1, window_bounds = array<i64: 128, 128>}, {pipeline_mode = #tpu.pipeline_mode<synchronous>, transform_indices = @transform_2, window_bounds = array<i64: 1, 128>}, {pipeline_mode = #tpu.pipeline_mode<synchronous>, transform_indices = @transform_3, window_bounds = array<i64: 128, 128>}, {pipeline_mode = #tpu.pipeline_mode<synchronous>, transform_indices = @transform_4, window_bounds = array<i64: 1, 128>}, {pipeline_mode = #tpu.pipeline_mode<synchronous>, transform_indices = @transform_5, window_bounds = array<i64: 128, 128>}, {pipeline_mode = #tpu.pipeline_mode<synchronous>, transform_indices = @transform_6, window_bounds = array<i64: 1, 128>}, {pipeline_mode = #tpu.pipeline_mode<synchronous>, transform_indices = @transform_7, window_bounds = array<i64: 128, 128>}, {pipeline_mode = #tpu.pipeline_mode<synchronous>, transform_indices = @transform_8, window_bounds = array<i64: 1, 128>}, {transform_indices = @transform_9, window_bounds = array<i64: 8, 128>}]} {
    %c0 = arith.constant 0 : index
    %c0_0 = arith.constant 0 : index
    %0 = vector.load %arg1[%c0, %c0_0] : memref<8x128xf32, #tpu.memory_space<vmem>>, vector<8x128xf32>
    %c0_1 = arith.constant 0 : index
    %c0_2 = arith.constant 0 : index
    %1 = vector.load %arg2[%c0_1, %c0_2] : memref<128x128xf32, #tpu.memory_space<vmem>>, vector<128x128xf32>
    %c0_3 = arith.constant 0 : index
    %c0_4 = arith.constant 0 : index
    %2 = vector.load %arg3[%c0_3, %c0_4] : memref<1x128xf32, #tpu.memory_space<vmem>>, vector<1x128xf32>
    %cst = arith.constant dense<0.000000e+00> : vector<8x128xf32>
    %3 = tpu.matmul %0, %1, %cst {dimension_numbers = #tpu.dot_dimension_numbers<[1], [0], [0], [1], [0, 0, 1, 1], [], []>} : vector<8x128xf32>, vector<128x128xf32>, vector<8x128xf32> -> vector<8x128xf32>
    %4 = vector.broadcast %2 : vector<1x128xf32> to vector<8x128xf32>
    %5 = arith.addf %3, %4 : vector<8x128xf32>
    %cst_5 = arith.constant 0.000000e+00 : f32
    %6 = vector.broadcast %cst_5 : f32 to vector<8x128xf32>
    %7 = arith.maximumf %5, %6 : vector<8x128xf32>
    %c0_6 = arith.constant 0 : index
    %c0_7 = arith.constant 0 : index
    %8 = vector.load %arg4[%c0_6, %c0_7] : memref<128x128xf32, #tpu.memory_space<vmem>>, vector<128x128xf32>
    %c0_8 = arith.constant 0 : index
    %c0_9 = arith.constant 0 : index
    %9 = vector.load %arg5[%c0_8, %c0_9] : memref<1x128xf32, #tpu.memory_space<vmem>>, vector<1x128xf32>
    %cst_10 = arith.constant dense<0.000000e+00> : vector<8x128xf32>
    %10 = tpu.matmul %7, %8, %cst_10 {dimension_numbers = #tpu.dot_dimension_numbers<[1], [0], [0], [1], [0, 0, 1, 1], [], []>} : vector<8x128xf32>, vector<128x128xf32>, vector<8x128xf32> -> vector<8x128xf32>
    %11 = vector.broadcast %9 : vector<1x128xf32> to vector<8x128xf32>
    %12 = arith.addf %10, %11 : vector<8x128xf32>
    %cst_11 = arith.constant 0.000000e+00 : f32
    %13 = vector.broadcast %cst_11 : f32 to vector<8x128xf32>
    %14 = arith.maximumf %12, %13 : vector<8x128xf32>
    %c0_12 = arith.constant 0 : index
    %c0_13 = arith.constant 0 : index
    %15 = vector.load %arg6[%c0_12, %c0_13] : memref<128x128xf32, #tpu.memory_space<vmem>>, vector<128x128xf32>
    %c0_14 = arith.constant 0 : index
    %c0_15 = arith.constant 0 : index
    %16 = vector.load %arg7[%c0_14, %c0_15] : memref<1x128xf32, #tpu.memory_space<vmem>>, vector<1x128xf32>
    %cst_16 = arith.constant dense<0.000000e+00> : vector<8x128xf32>
    %17 = tpu.matmul %14, %15, %cst_16 {dimension_numbers = #tpu.dot_dimension_numbers<[1], [0], [0], [1], [0, 0, 1, 1], [], []>} : vector<8x128xf32>, vector<128x128xf32>, vector<8x128xf32> -> vector<8x128xf32>
    %18 = vector.broadcast %16 : vector<1x128xf32> to vector<8x128xf32>
    %19 = arith.addf %17, %18 : vector<8x128xf32>
    %cst_17 = arith.constant 0.000000e+00 : f32
    %20 = vector.broadcast %cst_17 : f32 to vector<8x128xf32>
    %21 = arith.maximumf %19, %20 : vector<8x128xf32>
    %c0_18 = arith.constant 0 : index
    %c0_19 = arith.constant 0 : index
    %22 = vector.load %arg8[%c0_18, %c0_19] : memref<128x128xf32, #tpu.memory_space<vmem>>, vector<128x128xf32>
    %c0_20 = arith.constant 0 : index
    %c0_21 = arith.constant 0 : index
    %23 = vector.load %arg9[%c0_20, %c0_21] : memref<1x128xf32, #tpu.memory_space<vmem>>, vector<1x128xf32>
    %cst_22 = arith.constant dense<0.000000e+00> : vector<8x128xf32>
    %24 = tpu.matmul %21, %22, %cst_22 {dimension_numbers = #tpu.dot_dimension_numbers<[1], [0], [0], [1], [0, 0, 1, 1], [], []>} : vector<8x128xf32>, vector<128x128xf32>, vector<8x128xf32> -> vector<8x128xf32>
    %25 = vector.broadcast %23 : vector<1x128xf32> to vector<8x128xf32>
    %26 = arith.addf %24, %25 : vector<8x128xf32>
    %cst_23 = arith.constant 0.000000e+00 : f32
    %27 = vector.broadcast %cst_23 : f32 to vector<8x128xf32>
    %28 = arith.maximumf %26, %27 : vector<8x128xf32>
    %c0_24 = arith.constant 0 : index
    %c0_25 = arith.constant 0 : index
    %29 = vector.load %arg10[%c0_24, %c0_25] : memref<8x128xf32, #tpu.memory_space<vmem>>, vector<8x128xf32>
    tpu.vector_store %arg10[%c0_24, %c0_25], %28 {strides = array<i32>} : memref<8x128xf32, #tpu.memory_space<vmem>>, vector<8x128xf32>,
    return
  }
  func.func @transform_0(%arg0: i32) -> (i32, i32) {
    %c0_i32 = arith.constant 0 : i32
    %c0_i32_0 = arith.constant 0 : i32
    return %arg0, %c0_i32 : i32, i32
  }
  func.func @transform_1(%arg0: i32) -> (i32, i32) {
    %c0_i32 = arith.constant 0 : i32
    %c0_i32_0 = arith.constant 0 : i32
    %c0_i32_1 = arith.constant 0 : i32
    return %c0_i32, %c0_i32_0 : i32, i32
  }
  func.func @transform_2(%arg0: i32) -> (i32, i32) {
    %c0_i32 = arith.constant 0 : i32
    %c0_i32_0 = arith.constant 0 : i32
    %c0_i32_1 = arith.constant 0 : i32
    return %c0_i32, %c0_i32_0 : i32, i32
  }
  func.func @transform_3(%arg0: i32) -> (i32, i32) {
    %c0_i32 = arith.constant 0 : i32
    %c0_i32_0 = arith.constant 0 : i32
    %c0_i32_1 = arith.constant 0 : i32
    return %c0_i32, %c0_i32_0 : i32, i32
  }
  func.func @transform_4(%arg0: i32) -> (i32, i32) {
    %c0_i32 = arith.constant 0 : i32
    %c0_i32_0 = arith.constant 0 : i32
    %c0_i32_1 = arith.constant 0 : i32
    return %c0_i32, %c0_i32_0 : i32, i32
  }
  func.func @transform_5(%arg0: i32) -> (i32, i32) {
    %c0_i32 = arith.constant 0 : i32
    %c0_i32_0 = arith.constant 0 : i32
    %c0_i32_1 = arith.constant 0 : i32
    return %c0_i32, %c0_i32_0 : i32, i32
  }
  func.func @transform_6(%arg0: i32) -> (i32, i32) {
    %c0_i32 = arith.constant 0 : i32
    %c0_i32_0 = arith.constant 0 : i32
    %c0_i32_1 = arith.constant 0 : i32
    return %c0_i32, %c0_i32_0 : i32, i32
  }
  func.func @transform_7(%arg0: i32) -> (i32, i32) {
    %c0_i32 = arith.constant 0 : i32
    %c0_i32_0 = arith.constant 0 : i32
    %c0_i32_1 = arith.constant 0 : i32
    return %c0_i32, %c0_i32_0 : i32, i32
  }
  func.func @transform_8(%arg0: i32) -> (i32, i32) {
    %c0_i32 = arith.constant 0 : i32
    %c0_i32_0 = arith.constant 0 : i32
    %c0_i32_1 = arith.constant 0 : i32
    return %c0_i32, %c0_i32_0 : i32, i32
  }
  func.func @transform_9(%arg0: i32) -> (i32, i32) {
    %c0_i32 = arith.constant 0 : i32
    %c0_i32_0 = arith.constant 0 : i32
    return %arg0, %c0_i32 : i32, i32
  }
}

</mosaic_0001>

<llo_original>
// kernel: benchmark_model_forward.1
$region0: #{benchmark_model_forward.1}
  #allocation0 [shape = 'u32[]', space=smem, size = 0x4, offset = 0x4, fixed_abs, tag = 'smem constant byte address 0x4 - core index']
  #allocation1 [shape = 'u32[144,128]{1,0:T(1,128)}', space=vmem, size = 0x12000, scoped, tag = 'internal scratch']
  %s0 = inlined_call_operand.vmem [shape: f32[8,128], index: 0, kind: input, shape index: {}]
  %s1 = inlined_call_operand.hbm [shape: f32[128,128], index: 1, kind: input, shape index: {}]
  %s2 = inlined_call_operand.vmem [shape: f32[1,128], index: 2, kind: input, shape index: {}]
  %s3 = inlined_call_operand.hbm [shape: f32[128,128], index: 3, kind: input, shape index: {}]
  %s4 = inlined_call_operand.vmem [shape: f32[1,128], index: 4, kind: input, shape index: {}]
  %s5 = inlined_call_operand.hbm [shape: f32[128,128], index: 5, kind: input, shape index: {}]
  %s6 = inlined_call_operand.vmem [shape: f32[1,128], index: 6, kind: input, shape index: {}]
  %s7 = inlined_call_operand.hbm [shape: f32[128,128], index: 7, kind: input, shape index: {}]
  %s8 = inlined_call_operand.vmem [shape: f32[1,128], index: 8, kind: input, shape index: {}]
  %s9 = inlined_call_operand.vmem [shape: f32[8,128], index: 9, kind: output, shape index: {}]
  %s10 = sld [smem:[#allocation0]]
  $region62: #{benchmark_model_forward.1} parent=0
    _
  %s12 = ssub.s32 1, %s10
  %s13 = scalar_select 0, %s12, %s10
  $region1: #{benchmark_model_forward.1} parent=0
    #allocation2 [shape = 'u8[65536]{0}', space=vmem, size = 0x10000, scoped, tag = 'input window, operand 1, single buffered']
    #allocation3 [shape = 's32[1]{0}', space=sflag, size = 0x4, scoped, tag = 'scoped memory for benchmark_model_forward.1']
    #allocation4 [shape = 'u8[65536]{0}', space=vmem, size = 0x10000, scoped, tag = 'input window, operand 3, single buffered']
    #allocation5 [shape = 's32[1]{0}', space=sflag, size = 0x4, scoped, tag = 'scoped memory for benchmark_model_forward.1']
    #allocation6 [shape = 'u8[65536]{0}', space=vmem, size = 0x10000, scoped, tag = 'input window, operand 5, single buffered']
    #allocation7 [shape = 'u8[65536]{0}', space=vmem, size = 0x10000, scoped, tag = 'input window, operand 7, single buffered']
    #allocation8 [shape = 's32[1]{0}', space=sflag, size = 0x4, scoped, tag = 'scoped memory for benchmark_model_forward.1']
    %14 = vsyncpa [#allocation3], 0
    %15 = vsyncpa [#allocation5], 0
    %16 = vsyncpa [#allocation8], 0
    // Predicated region
    $region2: #{benchmark_model_forward.1} parent=1 // pred_check
      _
    $region3: #{benchmark_model_forward.1} parent=1 // pred_check_branch
      %18 = sbr.rel (0) target = $region5
    $region4: #{benchmark_model_forward.1} parent=1 // pred_region
      _
    $region5: #{benchmark_model_forward.1} parent=1 // pred_fallthru
      _
    // Predicated region
    $region6: #{benchmark_model_forward.1} parent=1 // pred_check
      _
    $region7: #{benchmark_model_forward.1} parent=1 // pred_check_branch
      %20 = sbr.rel (0) target = $region9
    $region8: #{benchmark_model_forward.1} parent=1 // pred_region
      %s22 = ssub.s32 2048, 2048
      %23 = vsyncadd [#allocation3], %s22
      %s24 = sshll.u32 [#allocation2], 4
      %s25 = int_to_ptr.vmem [resolvable:$true] %s24
      %30 = dma.hbm_to_vmem [thread:$0]  %s1, 2048, %s25, [#allocation3], 128, 128, 8
    $region9: #{benchmark_model_forward.1} parent=1 // pred_fallthru
      _
    // Predicated region
    $region10: #{benchmark_model_forward.1} parent=1 // pred_check
      _
    $region11: #{benchmark_model_forward.1} parent=1 // pred_check_branch
      %32 = sbr.rel (0) target = $region13
    $region12: #{benchmark_model_forward.1} parent=1 // pred_region
      _
    $region13: #{benchmark_model_forward.1} parent=1 // pred_fallthru
      _
    // Predicated region
    $region14: #{benchmark_model_forward.1} parent=1 // pred_check
      _
    $region15: #{benchmark_model_forward.1} parent=1 // pred_check_branch
      %34 = sbr.rel (0) target = $region17
    $region16: #{benchmark_model_forward.1} parent=1 // pred_region
      %s36 = ssub.s32 2048, 2048
      %37 = vsyncadd [#allocation5], %s36
      %s38 = sshll.u32 [#allocation4], 4
      %s39 = int_to_ptr.vmem [resolvable:$true] %s38
      %44 = dma.hbm_to_vmem [thread:$0]  %s3, 2048, %s39, [#allocation5], 128, 128, 8
    $region17: #{benchmark_model_forward.1} parent=1 // pred_fallthru
      _
    // Predicated region
    $region18: #{benchmark_model_forward.1} parent=1 // pred_check
      _
    $region19: #{benchmark_model_forward.1} parent=1 // pred_check_branch
      %46 = sbr.rel (0) target = $region21
    $region20: #{benchmark_model_forward.1} parent=1 // pred_region
      _
    $region21: #{benchmark_model_forward.1} parent=1 // pred_fallthru
      _
    // Predicated region
    $region22: #{benchmark_model_forward.1} parent=1 // pred_check
      _
    $region23: #{benchmark_model_forward.1} parent=1 // pred_check_branch
      %48 = sbr.rel (0) target = $region25
    $region24: #{benchmark_model_forward.1} parent=1 // pred_region
      %s50 = ssub.s32 2048, 2048
      %51 = vsyncadd [#allocation5], %s50
      %s52 = sshll.u32 [#allocation6], 4
      %s53 = int_to_ptr.vmem [resolvable:$true] %s52
      %58 = dma.hbm_to_vmem [thread:$0]  %s5, 2048, %s53, [#allocation5], 128, 128, 8
    $region25: #{benchmark_model_forward.1} parent=1 // pred_fallthru
      _
    // Predicated region
    $region26: #{benchmark_model_forward.1} parent=1 // pred_check
      _
    $region27: #{benchmark_model_forward.1} parent=1 // pred_check_branch
      %60 = sbr.rel (0) target = $region29
    $region28: #{benchmark_model_forward.1} parent=1 // pred_region
      _
    $region29: #{benchmark_model_forward.1} parent=1 // pred_fallthru
      _
    // Predicated region
    $region30: #{benchmark_model_forward.1} parent=1 // pred_check
      _
    $region31: #{benchmark_model_forward.1} parent=1 // pred_check_branch
      %62 = sbr.rel (0) target = $region33
    $region32: #{benchmark_model_forward.1} parent=1 // pred_region
      %s64 = ssub.s32 2048, 2048
      %65 = vsyncadd [#allocation8], %s64
      %s66 = sshll.u32 [#allocation7], 4
      %s67 = int_to_ptr.vmem [resolvable:$true] %s66
      %72 = dma.hbm_to_vmem [thread:$0]  %s7, 2048, %s67, [#allocation8], 128, 128, 8
    $region33: #{benchmark_model_forward.1} parent=1 // pred_fallthru
      _
    // Predicated region
    $region34: #{benchmark_model_forward.1} parent=1 // pred_check
      _
    $region35: #{benchmark_model_forward.1} parent=1 // pred_check_branch
      %74 = sbr.rel (0) target = $region37
    $region36: #{benchmark_model_forward.1} parent=1 // pred_region
      _
    $region37: #{benchmark_model_forward.1} parent=1 // pred_fallthru
      _
    // Predicated region
    $region38: #{benchmark_model_forward.1} parent=1 // pred_check
      _
    $region39: #{benchmark_model_forward.1} parent=1 // pred_check_branch
      %76 = sbr.rel (0) target = $region41
    $region40: #{benchmark_model_forward.1} parent=1 // pred_region
      %77 = dma.done [#allocation3], 2048
    $region41: #{benchmark_model_forward.1} parent=1 // pred_fallthru
      _
    // Predicated region
    $region42: #{benchmark_model_forward.1} parent=1 // pred_check
      _
    $region43: #{benchmark_model_forward.1} parent=1 // pred_check_branch
      %79 = sbr.rel (0) target = $region45
    $region44: #{benchmark_model_forward.1} parent=1 // pred_region
      %80 = dma.done [#allocation5], 2048
    $region45: #{benchmark_model_forward.1} parent=1 // pred_fallthru
      _
    // Predicated region
    $region46: #{benchmark_model_forward.1} parent=1 // pred_check
      _
    $region47: #{benchmark_model_forward.1} parent=1 // pred_check_branch
      %82 = sbr.rel (0) target = $region49
    $region48: #{benchmark_model_forward.1} parent=1 // pred_region
      %83 = dma.done [#allocation5], 2048
    $region49: #{benchmark_model_forward.1} parent=1 // pred_fallthru
      _
    // Predicated region
    $region50: #{benchmark_model_forward.1} parent=1 // pred_check
      _
    $region51: #{benchmark_model_forward.1} parent=1 // pred_check_branch
      %85 = sbr.rel (0) target = $region53
    $region52: #{benchmark_model_forward.1} parent=1 // pred_region
      %86 = dma.done [#allocation8], 2048
    $region53: #{benchmark_model_forward.1} parent=1 // pred_fallthru
      _
    %v87 = vld [vmem:[%s0] sm:$0xff]
    %v88 = vld [vmem:[#allocation2] sm:$0xff]
    %v89 = vld [vmem:[#allocation2 + $0x8] sm:$0xff]
    %v90 = vld [vmem:[#allocation2 + $0x10] sm:$0xff]
    %v91 = vld [vmem:[#allocation2 + $0x18] sm:$0xff]
    %v92 = vld [vmem:[#allocation2 + $0x20] sm:$0xff]
    %v93 = vld [vmem:[#allocation2 + $0x28] sm:$0xff]
    %v94 = vld [vmem:[#allocation2 + $0x30] sm:$0xff]
    %v95 = vld [vmem:[#allocation2 + $0x38] sm:$0xff]
    %v96 = vld [vmem:[#allocation2 + $0x40] sm:$0xff]
    %v97 = vld [vmem:[#allocation2 + $0x48] sm:$0xff]
    %v98 = vld [vmem:[#allocation2 + $0x50] sm:$0xff]
    %v99 = vld [vmem:[#allocation2 + $0x58] sm:$0xff]
    %v100 = vld [vmem:[#allocation2 + $0x60] sm:$0xff]
    %v101 = vld [vmem:[#allocation2 + $0x68] sm:$0xff]
    %v102 = vld [vmem:[#allocation2 + $0x70] sm:$0xff]
    %v103 = vld [vmem:[#allocation2 + $0x78] sm:$0xff]
    %v104 = vld [vmem:[%s2] sm:$0x1]
    %v106 = vlaneseq
    %v107 = vshrl.u32 %v106, 7
    %v108 = vsub.s32 0, %v107
    %v109 = vrot.slane %v104, %v108
    %111 = vmatprep.subr.mxu0 0.0
    %112 = vmatpush1.msra.mxu0 %v88
    %113 = vmatprep.subr.mxu0 0.0
    %114 = vmatpush1.msra.mxu0 %v89
    %115 = vmatprep.subr.mxu0 0.0
    %116 = vmatpush1.msra.mxu0 %v90
    %117 = vmatprep.subr.mxu0 0.0
    %118 = vmatpush1.msra.mxu0 %v91
    %119 = vmatprep.subr.mxu0 0.0
    %120 = vmatpush1.msra.mxu0 %v92
    %121 = vmatprep.subr.mxu0 0.0
    %122 = vmatpush1.msra.mxu0 %v93
    %123 = vmatprep.subr.mxu0 0.0
    %124 = vmatpush1.msra.mxu0 %v94
    %125 = vmatprep.subr.mxu0 0.0
    %126 = vmatpush1.msra.mxu0 %v95
    %127 = vmatprep.subr.mxu0 0.0
    %128 = vmatpush1.msra.mxu0 %v96
    %129 = vmatprep.subr.mxu0 0.0
    %130 = vmatpush1.msra.mxu0 %v97
    %131 = vmatprep.subr.mxu0 0.0
    %132 = vmatpush1.msra.mxu0 %v98
    %133 = vmatprep.subr.mxu0 0.0
    %134 = vmatpush1.msra.mxu0 %v99
    %135 = vmatprep.subr.mxu0 0.0
    %136 = vmatpush1.msra.mxu0 %v100
    %137 = vmatprep.subr.mxu0 0.0
    %138 = vmatpush1.msra.mxu0 %v101
    %139 = vmatprep.subr.mxu0 0.0
    %140 = vmatpush1.msra.mxu0 %v102
    %141 = vmatprep.subr.mxu0 0.0
    %142 = vmatpush1.msra.mxu0 %v103
    %143 = vmatprep.subr.mxu0 0.0
    %144 = vmatpush1.msra.mxu0 0.0
    %145 = vmatprep.subr.mxu0 0.0
    %146 = vmatpush1.msra.mxu0 0.0
    %147 = vmatprep.subr.mxu0 0.0
    %148 = vmatpush1.msra.mxu0 0.0
    %149 = vmatprep.subr.mxu0 0.0
    %150 = vmatpush1.msra.mxu0 0.0
    %151 = vmatprep.subr.mxu0 0.0
    %152 = vmatpush1.msra.mxu0 0.0
    %153 = vmatprep.subr.mxu0 0.0
    %154 = vmatpush1.msra.mxu0 0.0
    %155 = vmatprep.subr.mxu0 0.0
    %156 = vmatpush1.msra.mxu0 0.0
    %157 = vmatprep.subr.mxu0 0.0
    %158 = vmatpush1.msra.mxu0 0.0
    %159 = vmatprep.subr.mxu0 0.0
    %160 = vmatpush1.msra.mxu0 0.0
    %161 = vmatprep.subr.mxu0 0.0
    %162 = vmatpush1.msra.mxu0 0.0
    %163 = vmatprep.subr.mxu0 0.0
    %164 = vmatpush1.msra.mxu0 0.0
    %165 = vmatprep.subr.mxu0 0.0
    %166 = vmatpush1.msra.mxu0 0.0
    %167 = vmatprep.subr.mxu0 0.0
    %168 = vmatpush1.msra.mxu0 0.0
    %169 = vmatprep.subr.mxu0 0.0
    %170 = vmatpush1.msra.mxu0 0.0
    %171 = vmatprep.subr.mxu0 0.0
    %172 = vmatpush1.msra.mxu0 0.0
    %173 = vmatprep.subr.mxu0 0.0
    %174 = vmatpush1.msra.mxu0 0.0
    %175 = vmatprep.mubr.f32.mxu0 0.0
    %176 = vmatmul.mubr.f32.gmra.mrb[0].mxu0 %v87
    %v177 = vpop.f32.mrb[0].mxu0
    %v178 = vadd.f32 %v109, %v177
    %v179 = vpop.f32.mrb[0].mxu0
    %180 = vdwg.mxu0
    %v181 = vmax.f32 %v178, 0.0
    %v182 = vld [vmem:[#allocation4] sm:$0xff]
    %v183 = vld [vmem:[#allocation4 + $0x8] sm:$0xff]
    %v184 = vld [vmem:[#allocation4 + $0x10] sm:$0xff]
    %v185 = vld [vmem:[#allocation4 + $0x18] sm:$0xff]
    %v186 = vld [vmem:[#allocation4 + $0x20] sm:$0xff]
    %v187 = vld [vmem:[#allocation4 + $0x28] sm:$0xff]
    %v188 = vld [vmem:[#allocation4 + $0x30] sm:$0xff]
    %v189 = vld [vmem:[#allocation4 + $0x38] sm:$0xff]
    %v190 = vld [vmem:[#allocation4 + $0x40] sm:$0xff]
    %v191 = vld [vmem:[#allocation4 + $0x48] sm:$0xff]
    %v192 = vld [vmem:[#allocation4 + $0x50] sm:$0xff]
    %v193 = vld [vmem:[#allocation4 + $0x58] sm:$0xff]
    %v194 = vld [vmem:[#allocation4 + $0x60] sm:$0xff]
    %v195 = vld [vmem:[#allocation4 + $0x68] sm:$0xff]
    %v196 = vld [vmem:[#allocation4 + $0x70] sm:$0xff]
    %v197 = vld [vmem:[#allocation4 + $0x78] sm:$0xff]
    %v198 = vld [vmem:[%s4] sm:$0x1]
    %v200 = vlaneseq
    %v201 = vshrl.u32 %v200, 7
    %v202 = vsub.s32 0, %v201
    %v203 = vrot.slane %v198, %v202
    %205 = vmatprep.subr.mxu0 0.0
    %206 = vmatpush1.msra.mxu0 %v182
    %207 = vmatprep.subr.mxu0 0.0
    %208 = vmatpush1.msra.mxu0 %v183
    %209 = vmatprep.subr.mxu0 0.0
    %210 = vmatpush1.msra.mxu0 %v184
    %211 = vmatprep.subr.mxu0 0.0
    %212 = vmatpush1.msra.mxu0 %v185
    %213 = vmatprep.subr.mxu0 0.0
    %214 = vmatpush1.msra.mxu0 %v186
    %215 = vmatprep.subr.mxu0 0.0
    %216 = vmatpush1.msra.mxu0 %v187
    %217 = vmatprep.subr.mxu0 0.0
    %218 = vmatpush1.msra.mxu0 %v188
    %219 = vmatprep.subr.mxu0 0.0
    %220 = vmatpush1.msra.mxu0 %v189
    %221 = vmatprep.subr.mxu0 0.0
    %222 = vmatpush1.msra.mxu0 %v190
    %223 = vmatprep.subr.mxu0 0.0
    %224 = vmatpush1.msra.mxu0 %v191
    %225 = vmatprep.subr.mxu0 0.0
    %226 = vmatpush1.msra.mxu0 %v192
    %227 = vmatprep.subr.mxu0 0.0
    %228 = vmatpush1.msra.mxu0 %v193
    %229 = vmatprep.subr.mxu0 0.0
    %230 = vmatpush1.msra.mxu0 %v194
    %231 = vmatprep.subr.mxu0 0.0
    %232 = vmatpush1.msra.mxu0 %v195
    %233 = vmatprep.subr.mxu0 0.0
    %234 = vmatpush1.msra.mxu0 %v196
    %235 = vmatprep.subr.mxu0 0.0
    %236 = vmatpush1.msra.mxu0 %v197
    %237 = vmatprep.subr.mxu0 0.0
    %238 = vmatpush1.msra.mxu0 0.0
    %239 = vmatprep.subr.mxu0 0.0
    %240 = vmatpush1.msra.mxu0 0.0
    %241 = vmatprep.subr.mxu0 0.0
    %242 = vmatpush1.msra.mxu0 0.0
    %243 = vmatprep.subr.mxu0 0.0
    %244 = vmatpush1.msra.mxu0 0.0
    %245 = vmatprep.subr.mxu0 0.0
    %246 = vmatpush1.msra.mxu0 0.0
    %247 = vmatprep.subr.mxu0 0.0
    %248 = vmatpush1.msra.mxu0 0.0
    %249 = vmatprep.subr.mxu0 0.0
    %250 = vmatpush1.msra.mxu0 0.0
    %251 = vmatprep.subr.mxu0 0.0
    %252 = vmatpush1.msra.mxu0 0.0
    %253 = vmatprep.subr.mxu0 0.0
    %254 = vmatpush1.msra.mxu0 0.0
    %255 = vmatprep.subr.mxu0 0.0
    %256 = vmatpush1.msra.mxu0 0.0
    %257 = vmatprep.subr.mxu0 0.0
    %258 = vmatpush1.msra.mxu0 0.0
    %259 = vmatprep.subr.mxu0 0.0
    %260 = vmatpush1.msra.mxu0 0.0
    %261 = vmatprep.subr.mxu0 0.0
    %262 = vmatpush1.msra.mxu0 0.0
    %263 = vmatprep.subr.mxu0 0.0
    %264 = vmatpush1.msra.mxu0 0.0
    %265 = vmatprep.subr.mxu0 0.0
    %266 = vmatpush1.msra.mxu0 0.0
    %267 = vmatprep.subr.mxu0 0.0
    %268 = vmatpush1.msra.mxu0 0.0
    %269 = vmatprep.mubr.f32.mxu0 0.0
    %270 = vmatmul.mubr.f32.gmra.mrb[0].mxu0 %v181
    %v271 = vpop.f32.mrb[0].mxu0
    %v272 = vadd.f32 %v203, %v271
    %v273 = vpop.f32.mrb[0].mxu0
    %274 = vdwg.mxu0
    %v275 = vmax.f32 %v272, 0.0
    %v276 = vld [vmem:[#allocation6] sm:$0xff]
    %v277 = vld [vmem:[#allocation6 + $0x8] sm:$0xff]
    %v278 = vld [vmem:[#allocation6 + $0x10] sm:$0xff]
    %v279 = vld [vmem:[#allocation6 + $0x18] sm:$0xff]
    %v280 = vld [vmem:[#allocation6 + $0x20] sm:$0xff]
    %v281 = vld [vmem:[#allocation6 + $0x28] sm:$0xff]
    %v282 = vld [vmem:[#allocation6 + $0x30] sm:$0xff]
    %v283 = vld [vmem:[#allocation6 + $0x38] sm:$0xff]
    %v284 = vld [vmem:[#allocation6 + $0x40] sm:$0xff]
    %v285 = vld [vmem:[#allocation6 + $0x48] sm:$0xff]
    %v286 = vld [vmem:[#allocation6 + $0x50] sm:$0xff]
    %v287 = vld [vmem:[#allocation6 + $0x58] sm:$0xff]
    %v288 = vld [vmem:[#allocation6 + $0x60] sm:$0xff]
    %v289 = vld [vmem:[#allocation6 + $0x68] sm:$0xff]
    %v290 = vld [vmem:[#allocation6 + $0x70] sm:$0xff]
    %v291 = vld [vmem:[#allocation6 + $0x78] sm:$0xff]
    %v292 = vld [vmem:[%s6] sm:$0x1]
    %v294 = vlaneseq
    %v295 = vshrl.u32 %v294, 7
    %v296 = vsub.s32 0, %v295
    %v297 = vrot.slane %v292, %v296
    %299 = vmatprep.subr.mxu0 0.0
    %300 = vmatpush1.msra.mxu0 %v276
    %301 = vmatprep.subr.mxu0 0.0
    %302 = vmatpush1.msra.mxu0 %v277
    %303 = vmatprep.subr.mxu0 0.0
    %304 = vmatpush1.msra.mxu0 %v278
    %305 = vmatprep.subr.mxu0 0.0
    %306 = vmatpush1.msra.mxu0 %v279
    %307 = vmatprep.subr.mxu0 0.0
    %308 = vmatpush1.msra.mxu0 %v280
    %309 = vmatprep.subr.mxu0 0.0
    %310 = vmatpush1.msra.mxu0 %v281
    %311 = vmatprep.subr.mxu0 0.0
    %312 = vmatpush1.msra.mxu0 %v282
    %313 = vmatprep.subr.mxu0 0.0
    %314 = vmatpush1.msra.mxu0 %v283
    %315 = vmatprep.subr.mxu0 0.0
    %316 = vmatpush1.msra.mxu0 %v284
    %317 = vmatprep.subr.mxu0 0.0
    %318 = vmatpush1.msra.mxu0 %v285
    %319 = vmatprep.subr.mxu0 0.0
    %320 = vmatpush1.msra.mxu0 %v286
    %321 = vmatprep.subr.mxu0 0.0
    %322 = vmatpush1.msra.mxu0 %v287
    %323 = vmatprep.subr.mxu0 0.0
    %324 = vmatpush1.msra.mxu0 %v288
    %325 = vmatprep.subr.mxu0 0.0
    %326 = vmatpush1.msra.mxu0 %v289
    %327 = vmatprep.subr.mxu0 0.0
    %328 = vmatpush1.msra.mxu0 %v290
    %329 = vmatprep.subr.mxu0 0.0
    %330 = vmatpush1.msra.mxu0 %v291
    %331 = vmatprep.subr.mxu0 0.0
    %332 = vmatpush1.msra.mxu0 0.0
    %333 = vmatprep.subr.mxu0 0.0
    %334 = vmatpush1.msra.mxu0 0.0
    %335 = vmatprep.subr.mxu0 0.0
    %336 = vmatpush1.msra.mxu0 0.0
    %337 = vmatprep.subr.mxu0 0.0
    %338 = vmatpush1.msra.mxu0 0.0
    %339 = vmatprep.subr.mxu0 0.0
    %340 = vmatpush1.msra.mxu0 0.0
    %341 = vmatprep.subr.mxu0 0.0
    %342 = vmatpush1.msra.mxu0 0.0
    %343 = vmatprep.subr.mxu0 0.0
    %344 = vmatpush1.msra.mxu0 0.0
    %345 = vmatprep.subr.mxu0 0.0
    %346 = vmatpush1.msra.mxu0 0.0
    %347 = vmatprep.subr.mxu0 0.0
    %348 = vmatpush1.msra.mxu0 0.0
    %349 = vmatprep.subr.mxu0 0.0
    %350 = vmatpush1.msra.mxu0 0.0
    %351 = vmatprep.subr.mxu0 0.0
    %352 = vmatpush1.msra.mxu0 0.0
    %353 = vmatprep.subr.mxu0 0.0
    %354 = vmatpush1.msra.mxu0 0.0
    %355 = vmatprep.subr.mxu0 0.0
    %356 = vmatpush1.msra.mxu0 0.0
    %357 = vmatprep.subr.mxu0 0.0
    %358 = vmatpush1.msra.mxu0 0.0
    %359 = vmatprep.subr.mxu0 0.0
    %360 = vmatpush1.msra.mxu0 0.0
    %361 = vmatprep.subr.mxu0 0.0
    %362 = vmatpush1.msra.mxu0 0.0
    %363 = vmatprep.mubr.f32.mxu0 0.0
    %364 = vmatmul.mubr.f32.gmra.mrb[0].mxu0 %v275
    %v365 = vpop.f32.mrb[0].mxu0
    %v366 = vadd.f32 %v297, %v365
    %v367 = vpop.f32.mrb[0].mxu0
    %368 = vdwg.mxu0
    %v369 = vmax.f32 %v366, 0.0
    %v370 = vld [vmem:[#allocation7] sm:$0xff]
    %v371 = vld [vmem:[#allocation7 + $0x8] sm:$0xff]
    %v372 = vld [vmem:[#allocation7 + $0x10] sm:$0xff]
    %v373 = vld [vmem:[#allocation7 + $0x18] sm:$0xff]
    %v374 = vld [vmem:[#allocation7 + $0x20] sm:$0xff]
    %v375 = vld [vmem:[#allocation7 + $0x28] sm:$0xff]
    %v376 = vld [vmem:[#allocation7 + $0x30] sm:$0xff]
    %v377 = vld [vmem:[#allocation7 + $0x38] sm:$0xff]
    %v378 = vld [vmem:[#allocation7 + $0x40] sm:$0xff]
    %v379 = vld [vmem:[#allocation7 + $0x48] sm:$0xff]
    %v380 = vld [vmem:[#allocation7 + $0x50] sm:$0xff]
    %v381 = vld [vmem:[#allocation7 + $0x58] sm:$0xff]
    %v382 = vld [vmem:[#allocation7 + $0x60] sm:$0xff]
    %v383 = vld [vmem:[#allocation7 + $0x68] sm:$0xff]
    %v384 = vld [vmem:[#allocation7 + $0x70] sm:$0xff]
    %v385 = vld [vmem:[#allocation7 + $0x78] sm:$0xff]
    %v386 = vld [vmem:[%s8] sm:$0x1]
    %v388 = vlaneseq
    %v389 = vshrl.u32 %v388, 7
    %v390 = vsub.s32 0, %v389
    %v391 = vrot.slane %v386, %v390
    %393 = vmatprep.subr.mxu0 0.0
    %394 = vmatpush1.msra.mxu0 %v370
    %395 = vmatprep.subr.mxu0 0.0
    %396 = vmatpush1.msra.mxu0 %v371
    %397 = vmatprep.subr.mxu0 0.0
    %398 = vmatpush1.msra.mxu0 %v372
    %399 = vmatprep.subr.mxu0 0.0
    %400 = vmatpush1.msra.mxu0 %v373
    %401 = vmatprep.subr.mxu0 0.0
    %402 = vmatpush1.msra.mxu0 %v374
    %403 = vmatprep.subr.mxu0 0.0
    %404 = vmatpush1.msra.mxu0 %v375
    %405 = vmatprep.subr.mxu0 0.0
    %406 = vmatpush1.msra.mxu0 %v376
    %407 = vmatprep.subr.mxu0 0.0
    %408 = vmatpush1.msra.mxu0 %v377
    %409 = vmatprep.subr.mxu0 0.0
    %410 = vmatpush1.msra.mxu0 %v378
    %411 = vmatprep.subr.mxu0 0.0
    %412 = vmatpush1.msra.mxu0 %v379
    %413 = vmatprep.subr.mxu0 0.0
    %414 = vmatpush1.msra.mxu0 %v380
    %415 = vmatprep.subr.mxu0 0.0
    %416 = vmatpush1.msra.mxu0 %v381
    %417 = vmatprep.subr.mxu0 0.0
    %418 = vmatpush1.msra.mxu0 %v382
    %419 = vmatprep.subr.mxu0 0.0
    %420 = vmatpush1.msra.mxu0 %v383
    %421 = vmatprep.subr.mxu0 0.0
    %422 = vmatpush1.msra.mxu0 %v384
    %423 = vmatprep.subr.mxu0 0.0
    %424 = vmatpush1.msra.mxu0 %v385
    %425 = vmatprep.subr.mxu0 0.0
    %426 = vmatpush1.msra.mxu0 0.0
    %427 = vmatprep.subr.mxu0 0.0
    %428 = vmatpush1.msra.mxu0 0.0
    %429 = vmatprep.subr.mxu0 0.0
    %430 = vmatpush1.msra.mxu0 0.0
    %431 = vmatprep.subr.mxu0 0.0
    %432 = vmatpush1.msra.mxu0 0.0
    %433 = vmatprep.subr.mxu0 0.0
    %434 = vmatpush1.msra.mxu0 0.0
    %435 = vmatprep.subr.mxu0 0.0
    %436 = vmatpush1.msra.mxu0 0.0
    %437 = vmatprep.subr.mxu0 0.0
    %438 = vmatpush1.msra.mxu0 0.0
    %439 = vmatprep.subr.mxu0 0.0
    %440 = vmatpush1.msra.mxu0 0.0
    %441 = vmatprep.subr.mxu0 0.0
    %442 = vmatpush1.msra.mxu0 0.0
    %443 = vmatprep.subr.mxu0 0.0
    %444 = vmatpush1.msra.mxu0 0.0
    %445 = vmatprep.subr.mxu0 0.0
    %446 = vmatpush1.msra.mxu0 0.0
    %447 = vmatprep.subr.mxu0 0.0
    %448 = vmatpush1.msra.mxu0 0.0
    %449 = vmatprep.subr.mxu0 0.0
    %450 = vmatpush1.msra.mxu0 0.0
    %451 = vmatprep.subr.mxu0 0.0
    %452 = vmatpush1.msra.mxu0 0.0
    %453 = vmatprep.subr.mxu0 0.0
    %454 = vmatpush1.msra.mxu0 0.0
    %455 = vmatprep.subr.mxu0 0.0
    %456 = vmatpush1.msra.mxu0 0.0
    %457 = vmatprep.mubr.f32.mxu0 0.0
    %458 = vmatmul.mubr.f32.gmra.mrb[0].mxu0 %v369
    %v459 = vpop.f32.mrb[0].mxu0
    %v460 = vadd.f32 %v391, %v459
    %v461 = vpop.f32.mrb[0].mxu0
    %462 = vdwg.mxu0
    %v463 = vmax.f32 %v460, 0.0
    %464 = vst [vmem:[%s9] sm:$0xff] %v463
    // Predicated region
    $region54: #{benchmark_model_forward.1} parent=1 // pred_check
      _
    $region55: #{benchmark_model_forward.1} parent=1 // pred_check_branch
      %466 = sbr.rel (0) target = $region57
    $region56: #{benchmark_model_forward.1} parent=1 // pred_region
      _
    $region57: #{benchmark_model_forward.1} parent=1 // pred_fallthru
      _
    // Predicated region
    $region58: #{benchmark_model_forward.1} parent=1 // pred_check
      _
    $region59: #{benchmark_model_forward.1} parent=1 // pred_check_branch
      %468 = sbr.rel (0) target = $region61
    $region60: #{benchmark_model_forward.1} parent=1 // pred_region
      _
    $region61: #{benchmark_model_forward.1} parent=1 // pred_fallthru
      _
    %469 = vsyncpa [#allocation3], 1
    %470 = vsyncpa [#allocation5], 1
    %471 = vsyncpa [#allocation8], 1

</llo_original>
